<compile_context>
chip_gen: v5e
topology: v5e:2x2
jax: 0.10.0
libtpu: 0.0.40
codegen_flags: <defaults>
</compile_context>

<pallas_src>
import functools

import jax
import jax.numpy as jnp
from jax import lax
from jax.experimental import pallas as pl
from jax.experimental.pallas import tpu as pltpu

_TARGET_BLOCK_BYTES = 8 * 1024 * 1024     # ~8 MiB of input per grid step
_VMEM_LIMIT_BYTES = 32 * 1024 * 1024      # room for the 2 x 8 MiB double buffer
_MIN_PALLAS_ELEMS = 8 * 128               # below one (8,128) tile -> plain XLA


def _num_core_splits():
    """2 on v7x (two TensorCores per chip), 1 elsewhere."""
    try:
        kind = jax.devices()[0].device_kind.lower()
    except Exception:
        return 1
    return 2 if ("v7" in kind or "7x" in kind) else 1


def _entropy_kernel(x_ref, o_ref, acc_ref, *, eps, block_rows, lanes,
                    total_rows, blocks_per_core):
    step = pl.program_id(1)

    @pl.when(step == 0)
    def _():
        acc_ref[...] = jnp.zeros_like(acc_ref)

    # Global block index (core-split aware) and number of valid rows in it.
    gbi = pl.program_id(0) * blocks_per_core + step
    valid_rows = total_rows - gbi * block_rows
    sub = block_rows // 8

    def accumulate(x):
        p = x * jnp.log(x + eps)                 # negated at finalize
        # (block_rows, lanes) -> (sub, 8, lanes): tile-aligned reshape, then a
        # leading-axis sum (pure VPU adds) into the (8, lanes) accumulator.
        acc_ref[...] += p.reshape(sub, 8, lanes).sum(axis=0)

    # Hot path: full block, no mask.
    @pl.when(valid_rows >= block_rows)
    def _():
        accumulate(x_ref[...].astype(jnp.float32))

    # Cold path: ragged tail block / fully-masked overshoot block.  Rows past
    # the valid range are zeroed before the log, so garbage cannot leak in and
    # 0 * log(0 + eps) == 0 keeps them neutral.
    @pl.when(valid_rows < block_rows)
    def _():
        row_ids = lax.broadcasted_iota(jnp.int32, (block_rows, lanes), 0)
        mask = row_ids < valid_rows
        accumulate(jnp.where(mask, x_ref[...].astype(jnp.float32), 0.0))

    @pl.when(step == pl.num_programs(1) - 1)
    def _():
        o_ref[...] = jnp.full((1, 1, 1), -jnp.sum(acc_ref[...]),
                              dtype=jnp.float32)


def entropy_loss_encap(x, eps=1e-12):
    """Pallas implementation of EntropyLossEncap.forward (f32 scalar loss)."""
    if x.ndim < 2 or x.ndim > 5:
        raise ValueError("wrong feature map size")
    channels = x.shape[1]
    total = x.size
    m_rows = total // channels            # rows of the reference (M, C) view

    # Tiny inputs: grid/DMA/finalize overhead dominates -> plain XLA.
    if total < _MIN_PALLAS_ELEMS:
        xf = x.astype(jnp.float32)
        return -jnp.sum(xf * jnp.log(xf + eps)) / m_rows

    # Flatten the raw buffer (permutation invariance -- no transpose) and
    # present it lane-dense: last dim a multiple of 128, rows a multiple of 8.
    flat = x.reshape(-1)
    lanes = next((c for c in (1024, 512, 256, 128) if total % c == 0), 128)
    padded = pl.cdiv(total, lanes * 8) * (lanes * 8)
    if padded != total:
        flat = jnp.pad(flat, (0, padded - total))   # zero pad is neutral
    rows = padded // lanes
    x2d = flat.reshape(rows, lanes)

    # Byte-budget block sizing (~8 MiB of input per step, dtype aware).
    block_elems = max(8 * lanes, _TARGET_BLOCK_BYTES // x.dtype.itemsize)
    block_rows = max(8, min(rows, (block_elems // lanes) // 8 * 8))
    num_row_blocks = pl.cdiv(rows, block_rows)

    # Split across TensorCores only on v7x and only when there is enough
    # work; on single-TC chips it just wastes HBM bandwidth on a fully-masked
    # overshoot block.
    num_splits = _num_core_splits() if num_row_blocks >= 2 else 1
    blocks_per_core = pl.cdiv(num_row_blocks, num_splits)

    def x_index_map(c, i):
        gbi = c * blocks_per_core + i
        # Clamp overshoot blocks on the last core (fully masked in-kernel).
        return (jnp.minimum(gbi, num_row_blocks - 1), 0)

    kernel = functools.partial(
        _entropy_kernel, eps=eps, block_rows=block_rows, lanes=lanes,
        total_rows=rows, blocks_per_core=blocks_per_core)

    cost = pl.CostEstimate(
        flops=3 * total, transcendentals=total,
        bytes_accessed=int(flat.size * flat.dtype.itemsize) + 4 * num_splits)

    # TODO(synk): on v7x, verify the leading "parallel" axis really shards
    # across the two TensorCores; if not, switch it to pltpu.CORE_PARALLEL.
    partials = pl.pallas_call(
        kernel,
        out_shape=jax.ShapeDtypeStruct((num_splits, 1, 1), jnp.float32),
        grid_spec=pltpu.PrefetchScalarGridSpec(
            num_scalar_prefetch=0,
            grid=(num_splits, blocks_per_core),
            in_specs=[pl.BlockSpec((block_rows, lanes), x_index_map)],
            out_specs=pl.BlockSpec((1, 1, 1), lambda c, i: (c, 0, 0)),
            scratch_shapes=[pltpu.VMEM((8, lanes), jnp.float32)],
        ),
        compiler_params=pltpu.CompilerParams(
            dimension_semantics=("parallel", "arbitrary"),
            vmem_limit_bytes=_VMEM_LIMIT_BYTES),
        cost_estimate=cost,
    )(x2d)

    return jnp.sum(partials) / m_rows


def _feature_map_permute_ref(x):
    s = x.shape
    if x.ndim == 2:
        xr = x
    elif x.ndim in (3, 4, 5):
        perm = (0,) + tuple(range(2, x.ndim)) + (1,)
        xr = jnp.transpose(x, perm)
    else:
        raise ValueError("wrong feature map size")
    return xr.reshape(-1, s[1])


def _reference(x, eps=1e-12):
    score = _feature_map_permute_ref(x)
    b = -(score * jnp.log(score + eps)).sum(axis=1)
    return b.mean()


if __name__ == "__main__":
    key = jax.random.PRNGKey(0)
    # Small NCHW input consistent with the module: batch=2, channels=4, 16x16.
    # Softmax over the channel axis so values look like a score map.
    logits = jax.random.normal(key, (2, 4, 16, 16), dtype=jnp.float32)
    x = jax.nn.softmax(logits, axis=1)

    loss = entropy_loss_encap(x)
    jax.block_until_ready(loss)

    ref = _reference(x)
    assert jnp.allclose(loss, ref, rtol=1e-5, atol=1e-6), (loss, ref)
    print("KERNEL_OK")
</pallas_src>

<mosaic_0001>
module attributes {stable_mosaic.version = 11 : i64} {
  func.func @_entropy_kernel(%arg0: i32, %arg1: i32, %arg2: memref<8x1024xf32, #tpu.memory_space<vmem>>, %arg3: memref<1x1x1xf32, #tpu.memory_space<vmem>>, %arg4: memref<8x1024xf32, #tpu.memory_space<vmem>>) attributes {dimension_semantics = [#tpu.dimension_semantics<parallel>, #tpu.dimension_semantics<arbitrary>], iteration_bounds = array<i64: 1, 1>, scalar_prefetch = 0 : i64, scratch_operands = 1 : i64, tpu.core_type = #tpu.core_type<tc>, window_params = [{transform_indices = @transform_0, window_bounds = array<i64: 8, 1024>}, {transform_indices = @transform_1, window_bounds = array<i64: 1, 1, 1>}]} {
    %c0_i32 = arith.constant 0 : i32
    %0 = arith.cmpi eq, %arg1, %c0_i32 : i32
    %1 = arith.extui %0 : i1 to i32
    %c0_i32_0 = arith.constant 0 : i32
    %2 = arith.cmpi ne, %1, %c0_i32_0 : i32
    scf.if %2 {
      %cst = arith.constant 0.000000e+00 : f32
      %16 = vector.broadcast %cst : f32 to vector<8x1024xf32>
      %c0 = arith.constant 0 : index
      %c0_8 = arith.constant 0 : index
      %17 = vector.load %arg4[%c0, %c0_8] : memref<8x1024xf32, #tpu.memory_space<vmem>>, vector<8x1024xf32>
      tpu.vector_store %arg4[%c0, %c0_8], %16 {strides = array<i32>} : memref<8x1024xf32, #tpu.memory_space<vmem>>, vector<8x1024xf32>,
    } else {
    }
    %c1_i32 = arith.constant 1 : i32
    %3 = arith.muli %arg0, %c1_i32 : i32
    %4 = arith.addi %3, %arg1 : i32
    %c8_i32 = arith.constant 8 : i32
    %5 = arith.muli %4, %c8_i32 : i32
    %c8_i32_1 = arith.constant 8 : i32
    %6 = arith.subi %c8_i32_1, %5 : i32
    %c8_i32_2 = arith.constant 8 : i32
    %7 = arith.cmpi sge, %6, %c8_i32_2 : i32
    %8 = arith.extui %7 : i1 to i32
    %c0_i32_3 = arith.constant 0 : i32
    %9 = arith.cmpi ne, %8, %c0_i32_3 : i32
    scf.if %9 {
      %c0 = arith.constant 0 : index
      %c0_8 = arith.constant 0 : index
      %16 = vector.load %arg2[%c0, %c0_8] : memref<8x1024xf32, #tpu.memory_space<vmem>>, vector<8x1024xf32>
      %cst = arith.constant 9.99999996E-13 : f32
      %17 = vector.broadcast %cst : f32 to vector<8x1024xf32>
      %18 = arith.addf %16, %17 : vector<8x1024xf32>
      %19 = math.log %18 : vector<8x1024xf32>
      %20 = arith.mulf %16, %19 : vector<8x1024xf32>
      %c0_9 = arith.constant 0 : index
      %c0_10 = arith.constant 0 : index
      %21 = vector.load %arg4[%c0_9, %c0_10] : memref<8x1024xf32, #tpu.memory_space<vmem>>, vector<8x1024xf32>
      %22 = vector.shape_cast %20 : vector<8x1024xf32> to vector<1x8x1024xf32>
      %cst_11 = arith.constant dense<0.000000e+00> : vector<8x1024xf32>
      %23 = vector.multi_reduction <add>, %22, %cst_11 [0] : vector<1x8x1024xf32> to vector<8x1024xf32>
      %24 = arith.addf %21, %23 : vector<8x1024xf32>
      %c0_12 = arith.constant 0 : index
      %c0_13 = arith.constant 0 : index
      %25 = vector.load %arg4[%c0_12, %c0_13] : memref<8x1024xf32, #tpu.memory_space<vmem>>, vector<8x1024xf32>
      tpu.vector_store %arg4[%c0_12, %c0_13], %24 {strides = array<i32>} : memref<8x1024xf32, #tpu.memory_space<vmem>>, vector<8x1024xf32>,
    } else {
    }
    %c8_i32_4 = arith.constant 8 : i32
    %10 = arith.cmpi slt, %6, %c8_i32_4 : i32
    %11 = arith.extui %10 : i1 to i32
    %c0_i32_5 = arith.constant 0 : i32
    %12 = arith.cmpi ne, %11, %c0_i32_5 : i32
    scf.if %12 {
      %16 = tpu.iota {dimensions = array<i32: 0>} : vector<8x1024xi32>
      %17 = vector.broadcast %6 : i32 to vector<8x1024xi32>
      %18 = arith.cmpi slt, %16, %17 : vector<8x1024xi32>
      %c0 = arith.constant 0 : index
      %c0_8 = arith.constant 0 : index
      %19 = vector.load %arg2[%c0, %c0_8] : memref<8x1024xf32, #tpu.memory_space<vmem>>, vector<8x1024xf32>
      %cst = arith.constant 0.000000e+00 : f32
      %20 = vector.broadcast %cst : f32 to vector<8x1024xf32>
      %21 = arith.select %18, %19, %20 : vector<8x1024xi1>, vector<8x1024xf32>
      %cst_9 = arith.constant 9.99999996E-13 : f32
      %22 = vector.broadcast %cst_9 : f32 to vector<8x1024xf32>
      %23 = arith.addf %21, %22 : vector<8x1024xf32>
      %24 = math.log %23 : vector<8x1024xf32>
      %25 = arith.mulf %21, %24 : vector<8x1024xf32>
      %c0_10 = arith.constant 0 : index
      %c0_11 = arith.constant 0 : index
      %26 = vector.load %arg4[%c0_10, %c0_11] : memref<8x1024xf32, #tpu.memory_space<vmem>>, vector<8x1024xf32>
      %27 = vector.shape_cast %25 : vector<8x1024xf32> to vector<1x8x1024xf32>
      %cst_12 = arith.constant dense<0.000000e+00> : vector<8x1024xf32>
      %28 = vector.multi_reduction <add>, %27, %cst_12 [0] : vector<1x8x1024xf32> to vector<8x1024xf32>
      %29 = arith.addf %26, %28 : vector<8x1024xf32>
      %c0_13 = arith.constant 0 : index
      %c0_14 = arith.constant 0 : index
      %30 = vector.load %arg4[%c0_13, %c0_14] : memref<8x1024xf32, #tpu.memory_space<vmem>>, vector<8x1024xf32>
      tpu.vector_store %arg4[%c0_13, %c0_14], %29 {strides = array<i32>} : memref<8x1024xf32, #tpu.memory_space<vmem>>, vector<8x1024xf32>,
    } else {
    }
    %c0_i32_6 = arith.constant 0 : i32
    %13 = arith.cmpi eq, %arg1, %c0_i32_6 : i32
    %14 = arith.extui %13 : i1 to i32
    %c0_i32_7 = arith.constant 0 : i32
    %15 = arith.cmpi ne, %14, %c0_i32_7 : i32
    scf.if %15 {
      %c0 = arith.constant 0 : index
      %c0_8 = arith.constant 0 : index
      %16 = vector.load %arg4[%c0, %c0_8] : memref<8x1024xf32, #tpu.memory_space<vmem>>, vector<8x1024xf32>
      %17 = vector.shape_cast %16 : vector<8x1024xf32> to vector<1x8x1024xf32>
      %cst = arith.constant dense<0.000000e+00> : vector<1xf32>
      %18 = vector.multi_reduction <add>, %17, %cst [1, 2] : vector<1x8x1024xf32> to vector<1xf32>
      %19 = vector.shape_cast %18 : vector<1xf32> to vector<1x1x1xf32>
      %20 = vector.extract %19[0, 0, 0] : f32 from vector<1x1x1xf32>
      %cst_9 = arith.constant 0.000000e+00 : f32
      %21 = arith.subf %cst_9, %20 : f32
      %22 = vector.broadcast %21 : f32 to vector<1x1x1xf32>
      %c0_10 = arith.constant 0 : index
      %c0_11 = arith.constant 0 : index
      %c0_12 = arith.constant 0 : index
      %23 = vector.load %arg3[%c0_10, %c0_11, %c0_12] : memref<1x1x1xf32, #tpu.memory_space<vmem>>, vector<1x1x1xf32>
      tpu.vector_store %arg3[%c0_10, %c0_11, %c0_12], %22 {strides = array<i32>} : memref<1x1x1xf32, #tpu.memory_space<vmem>>, vector<1x1x1xf32>,
    } else {
    }
    return
  }
  func.func @transform_0(%arg0: i32, %arg1: i32) -> (i32, i32) {
    %c1_i32 = arith.constant 1 : i32
    %0 = arith.muli %arg0, %c1_i32 : i32
    %1 = arith.addi %0, %arg1 : i32
    %c0_i32 = arith.constant 0 : i32
    %2 = arith.minsi %1, %c0_i32 : i32
    %c0_i32_0 = arith.constant 0 : i32
    %c0_i32_1 = arith.constant 0 : i32
    return %2, %c0_i32_0 : i32, i32
  }
  func.func @transform_1(%arg0: i32, %arg1: i32) -> (i32, i32, i32) {
    %c0_i32 = arith.constant 0 : i32
    %c0_i32_0 = arith.constant 0 : i32
    %c0_i32_1 = arith.constant 0 : i32
    return %arg0, %c0_i32, %c0_i32_0 : i32, i32, i32
  }
}

</mosaic_0001>

<llo_original>
// kernel: tpu_custom_call.1
$region0: #{tpu_custom_call.1}
  #allocation0 [shape = 'u32[]', space=smem, size = 0x4, offset = 0x4, fixed_abs, tag = 'smem constant byte address 0x4 - core index']
  #allocation1 [shape = 'u32[72,128]{1,0:T(1,128)}', space=vmem, size = 0x9000, scoped, tag = 'internal scratch']
  #allocation2 [shape = 'f32[8,1024]{1,0:T(8,128)}', space=vmem, size = 0x8000, scoped, tag = 'scratch operand']
  %s0 = inlined_call_operand.hbm [shape: f32[8,1024], index: 0, kind: input, shape index: {}]
  %s1 = inlined_call_operand.hbm [shape: f32[1,1,1], index: 1, kind: output, shape index: {}]
  %s2 = sld [smem:[#allocation0]]
  $region34: #{tpu_custom_call.1} parent=0
    _
  %s4 = ssub.s32 1, %s2
  %s5 = scalar_select 0, %s4, %s2
  $region1: #{tpu_custom_call.1} parent=0
    #allocation3 [shape = 'u8[32768]{0}', space=vmem, size = 0x8000, scoped, tag = 'input window, operand 0, single buffered']
    #allocation4 [shape = 's32[1]{0}', space=sflag, size = 0x4, scoped, tag = 'scoped memory for tpu_custom_call.1']
    #allocation5 [shape = 's32[1]{0}', space=sflag, size = 0x4, scoped, tag = 'scoped memory for tpu_custom_call.1']
    #allocation6 [shape = 'u8[512]{0}', space=vmem, size = 0x400, scoped, tag = 'output window, operand 0, single buffered']
    %6 = vsyncpa [#allocation4], 0
    %7 = vsyncpa [#allocation5], 0
    // Predicated region
    $region2: #{tpu_custom_call.1} parent=1 // pred_check
      _
    $region3: #{tpu_custom_call.1} parent=1 // pred_check_branch
      %9 = sbr.rel (0) target = $region5
    $region4: #{tpu_custom_call.1} parent=1 // pred_region
      %s10 = sadd.s32 0, 0
      %p11 = scmp.lt.s32.totalorder %s10, 0
      %s12 = scalar_select %p11, %s10, 0
      %14 = vsyncadd [#allocation4], 0
      %s15 = smul.addr %s12, 8
      %s16 = smul.addr %s15, 8
      %s17 = scalar_lea.hbm %s0, %s16
      %s19 = sshll.u32 %s17, 4
      %s20 = int_to_ptr.hbm [resolvable:$true] %s19
      %s21 = sshll.u32 [#allocation3], 4
      %s22 = int_to_ptr.vmem [resolvable:$true] %s21
      %24 = dma.hbm_to_vmem [thread:$0]  %s20, 1024, %s22, [#allocation4]
    $region5: #{tpu_custom_call.1} parent=1 // pred_fallthru
      _
    // Predicated region
    $region6: #{tpu_custom_call.1} parent=1 // pred_check
      _
    $region7: #{tpu_custom_call.1} parent=1 // pred_check_branch
      %26 = sbr.rel (0) target = $region9
    $region8: #{tpu_custom_call.1} parent=1 // pred_region
      %28 = dma.done [#allocation4], 1024
    $region9: #{tpu_custom_call.1} parent=1 // pred_fallthru
      _
    %s29 = sadd.s32 0, 0
    %p30 = scmp.lt.s32.totalorder %s29, 0
    %s31 = scalar_select %p30, %s29, 0
    %p32 = scmp.eq.s32.totalorder 0, 0
    // Predicated region
    $region10: #{tpu_custom_call.1} parent=1 // pred_check
      %p33 = pneg %p32
    $region11: #{tpu_custom_call.1} parent=1 // pred_check_branch
      %35 = sbr.rel (%p33) target = $region13
    $region12: #{tpu_custom_call.1} parent=1 // pred_region
      %36 = vst [vmem:[#allocation2] sm:$0xff] 0.0
      %37 = vst [vmem:[#allocation2 + $0x8] sm:$0xff] 0.0
      %38 = vst [vmem:[#allocation2 + $0x10] sm:$0xff] 0.0
      %39 = vst [vmem:[#allocation2 + $0x18] sm:$0xff] 0.0
      %40 = vst [vmem:[#allocation2 + $0x20] sm:$0xff] 0.0
      %41 = vst [vmem:[#allocation2 + $0x28] sm:$0xff] 0.0
      %42 = vst [vmem:[#allocation2 + $0x30] sm:$0xff] 0.0
      %43 = vst [vmem:[#allocation2 + $0x38] sm:$0xff] 0.0
    $region13: #{tpu_custom_call.1} parent=1 // pred_fallthru
      _
    %s44 = sadd.s32 0, 0
    %s45 = smul.u32 %s44, 8
    %s46 = ssub.s32 8, %s45
    %p47 = scmp.ge.s32.totalorder %s46, 8
    // Predicated region
    $region14: #{tpu_custom_call.1} parent=1 // pred_check
      %p48 = pneg %p47
    $region15: #{tpu_custom_call.1} parent=1 // pred_check_branch
      %50 = sbr.rel (%p48) target = $region17
    $region16: #{tpu_custom_call.1} parent=1 // pred_region
      %v51 = vld [vmem:[#allocation3] sm:$0xff]
      %v52 = vld [vmem:[#allocation3 + $0x8] sm:$0xff]
      %v53 = vld [vmem:[#allocation3 + $0x10] sm:$0xff]
      %v54 = vld [vmem:[#allocation3 + $0x18] sm:$0xff]
      %v55 = vld [vmem:[#allocation3 + $0x20] sm:$0xff]
      %v56 = vld [vmem:[#allocation3 + $0x28] sm:$0xff]
      %v57 = vld [vmem:[#allocation3 + $0x30] sm:$0xff]
      %v58 = vld [vmem:[#allocation3 + $0x38] sm:$0xff]
      %v59 = vadd.f32 %v51, 1e-12
      %v60 = vadd.f32 %v52, 1e-12
      %v61 = vadd.f32 %v53, 1e-12
      %v62 = vadd.f32 %v54, 1e-12
      %v63 = vadd.f32 %v55, 1e-12
      %v64 = vadd.f32 %v56, 1e-12
      %v65 = vadd.f32 %v57, 1e-12
      %v66 = vadd.f32 %v58, 1e-12
      %v67 = vlog2.pop %v59
      %v68 = vmul.f32 %v67, 0.6931472
      %v69 = vlog2.pop %v60
      %v70 = vmul.f32 %v69, 0.6931472
      %v71 = vlog2.pop %v61
      %v72 = vmul.f32 %v71, 0.6931472
      %v73 = vlog2.pop %v62
      %v74 = vmul.f32 %v73, 0.6931472
      %v75 = vlog2.pop %v63
      %v76 = vmul.f32 %v75, 0.6931472
      %v77 = vlog2.pop %v64
      %v78 = vmul.f32 %v77, 0.6931472
      %v79 = vlog2.pop %v65
      %v80 = vmul.f32 %v79, 0.6931472
      %v81 = vlog2.pop %v66
      %v82 = vmul.f32 %v81, 0.6931472
      %v83 = vmul.f32 %v51, %v68
      %v84 = vmul.f32 %v52, %v70
      %v85 = vmul.f32 %v53, %v72
      %v86 = vmul.f32 %v54, %v74
      %v87 = vmul.f32 %v55, %v76
      %v88 = vmul.f32 %v56, %v78
      %v89 = vmul.f32 %v57, %v80
      %v90 = vmul.f32 %v58, %v82
      %v91 = vld [vmem:[#allocation2] sm:$0xff]
      %v92 = vld [vmem:[#allocation2 + $0x8] sm:$0xff]
      %v93 = vld [vmem:[#allocation2 + $0x10] sm:$0xff]
      %v94 = vld [vmem:[#allocation2 + $0x18] sm:$0xff]
      %v95 = vld [vmem:[#allocation2 + $0x20] sm:$0xff]
      %v96 = vld [vmem:[#allocation2 + $0x28] sm:$0xff]
      %v97 = vld [vmem:[#allocation2 + $0x30] sm:$0xff]
      %v98 = vld [vmem:[#allocation2 + $0x38] sm:$0xff]
      %v99 = vadd.f32 %v83, 0.0
      %v100 = vadd.f32 %v84, 0.0
      %v101 = vadd.f32 %v85, 0.0
      %v102 = vadd.f32 %v86, 0.0
      %v103 = vadd.f32 %v87, 0.0
      %v104 = vadd.f32 %v88, 0.0
      %v105 = vadd.f32 %v89, 0.0
      %v106 = vadd.f32 %v90, 0.0
      %v107 = vadd.f32 %v91, %v99
      %v108 = vadd.f32 %v92, %v100
      %v109 = vadd.f32 %v93, %v101
      %v110 = vadd.f32 %v94, %v102
      %v111 = vadd.f32 %v95, %v103
      %v112 = vadd.f32 %v96, %v104
      %v113 = vadd.f32 %v97, %v105
      %v114 = vadd.f32 %v98, %v106
      %115 = vst [vmem:[#allocation2] sm:$0xff] %v107
      %116 = vst [vmem:[#allocation2 + $0x8] sm:$0xff] %v108
      %117 = vst [vmem:[#allocation2 + $0x10] sm:$0xff] %v109
      %118 = vst [vmem:[#allocation2 + $0x18] sm:$0xff] %v110
      %119 = vst [vmem:[#allocation2 + $0x20] sm:$0xff] %v111
      %120 = vst [vmem:[#allocation2 + $0x28] sm:$0xff] %v112
      %121 = vst [vmem:[#allocation2 + $0x30] sm:$0xff] %v113
      %122 = vst [vmem:[#allocation2 + $0x38] sm:$0xff] %v114
    $region17: #{tpu_custom_call.1} parent=1 // pred_fallthru
      _
    %p123 = scmp.lt.s32.totalorder %s46, 8
    // Predicated region
    $region18: #{tpu_custom_call.1} parent=1 // pred_check
      %p124 = pneg %p123
    $region19: #{tpu_custom_call.1} parent=1 // pred_check_branch
      %126 = sbr.rel (%p124) target = $region21
    $region20: #{tpu_custom_call.1} parent=1 // pred_region
      %v127 = vlaneseq
      %v128 = vshrl.u32 %v127, 7
      %v129 = vstv %s46
      %vm130 = vcmp.lt.s32.totalorder %v128, %v129
      %v131 = vld [vmem:[#allocation3] sm:$0xff]
      %v132 = vld [vmem:[#allocation3 + $0x8] sm:$0xff]
      %v133 = vld [vmem:[#allocation3 + $0x10] sm:$0xff]
      %v134 = vld [vmem:[#allocation3 + $0x18] sm:$0xff]
      %v135 = vld [vmem:[#allocation3 + $0x20] sm:$0xff]
      %v136 = vld [vmem:[#allocation3 + $0x28] sm:$0xff]
      %v137 = vld [vmem:[#allocation3 + $0x30] sm:$0xff]
      %v138 = vld [vmem:[#allocation3 + $0x38] sm:$0xff]
      %v139 = vsel %vm130, %v131, 0.0
      %v140 = vsel %vm130, %v132, 0.0
      %v141 = vsel %vm130, %v133, 0.0
      %v142 = vsel %vm130, %v134, 0.0
      %v143 = vsel %vm130, %v135, 0.0
      %v144 = vsel %vm130, %v136, 0.0
      %v145 = vsel %vm130, %v137, 0.0
      %v146 = vsel %vm130, %v138, 0.0
      %v147 = vadd.f32 %v139, 1e-12
      %v148 = vadd.f32 %v140, 1e-12
      %v149 = vadd.f32 %v141, 1e-12
      %v150 = vadd.f32 %v142, 1e-12
      %v151 = vadd.f32 %v143, 1e-12
      %v152 = vadd.f32 %v144, 1e-12
      %v153 = vadd.f32 %v145, 1e-12
      %v154 = vadd.f32 %v146, 1e-12
      %v155 = vlog2.pop %v147
      %v156 = vmul.f32 %v155, 0.6931472
      %v157 = vlog2.pop %v148
      %v158 = vmul.f32 %v157, 0.6931472
      %v159 = vlog2.pop %v149
      %v160 = vmul.f32 %v159, 0.6931472
      %v161 = vlog2.pop %v150
      %v162 = vmul.f32 %v161, 0.6931472
      %v163 = vlog2.pop %v151
      %v164 = vmul.f32 %v163, 0.6931472
      %v165 = vlog2.pop %v152
      %v166 = vmul.f32 %v165, 0.6931472
      %v167 = vlog2.pop %v153
      %v168 = vmul.f32 %v167, 0.6931472
      %v169 = vlog2.pop %v154
      %v170 = vmul.f32 %v169, 0.6931472
      %v171 = vmul.f32 %v139, %v156
      %v172 = vmul.f32 %v140, %v158
      %v173 = vmul.f32 %v141, %v160
      %v174 = vmul.f32 %v142, %v162
      %v175 = vmul.f32 %v143, %v164
      %v176 = vmul.f32 %v144, %v166
      %v177 = vmul.f32 %v145, %v168
      %v178 = vmul.f32 %v146, %v170
      %v179 = vld [vmem:[#allocation2] sm:$0xff]
      %v180 = vld [vmem:[#allocation2 + $0x8] sm:$0xff]
      %v181 = vld [vmem:[#allocation2 + $0x10] sm:$0xff]
      %v182 = vld [vmem:[#allocation2 + $0x18] sm:$0xff]
      %v183 = vld [vmem:[#allocation2 + $0x20] sm:$0xff]
      %v184 = vld [vmem:[#allocation2 + $0x28] sm:$0xff]
      %v185 = vld [vmem:[#allocation2 + $0x30] sm:$0xff]
      %v186 = vld [vmem:[#allocation2 + $0x38] sm:$0xff]
      %v187 = vadd.f32 %v171, 0.0
      %v188 = vadd.f32 %v172, 0.0
      %v189 = vadd.f32 %v173, 0.0
      %v190 = vadd.f32 %v174, 0.0
      %v191 = vadd.f32 %v175, 0.0
      %v192 = vadd.f32 %v176, 0.0
      %v193 = vadd.f32 %v177, 0.0
      %v194 = vadd.f32 %v178, 0.0
      %v195 = vadd.f32 %v179, %v187
      %v196 = vadd.f32 %v180, %v188
      %v197 = vadd.f32 %v181, %v189
      %v198 = vadd.f32 %v182, %v190
      %v199 = vadd.f32 %v183, %v191
      %v200 = vadd.f32 %v184, %v192
      %v201 = vadd.f32 %v185, %v193
      %v202 = vadd.f32 %v186, %v194
      %203 = vst [vmem:[#allocation2] sm:$0xff] %v195
      %204 = vst [vmem:[#allocation2 + $0x8] sm:$0xff] %v196
      %205 = vst [vmem:[#allocation2 + $0x10] sm:$0xff] %v197
      %206 = vst [vmem:[#allocation2 + $0x18] sm:$0xff] %v198
      %207 = vst [vmem:[#allocation2 + $0x20] sm:$0xff] %v199
      %208 = vst [vmem:[#allocation2 + $0x28] sm:$0xff] %v200
      %209 = vst [vmem:[#allocation2 + $0x30] sm:$0xff] %v201
      %210 = vst [vmem:[#allocation2 + $0x38] sm:$0xff] %v202
    $region21: #{tpu_custom_call.1} parent=1 // pred_fallthru
      _
    // Predicated region
    $region22: #{tpu_custom_call.1} parent=1 // pred_check
      %p211 = pneg %p32
    $region23: #{tpu_custom_call.1} parent=1 // pred_check_branch
      %213 = sbr.rel (%p211) target = $region25
    $region24: #{tpu_custom_call.1} parent=1 // pred_region
      %v214 = vld [vmem:[#allocation2] sm:$0xff]
      %v215 = vld [vmem:[#allocation2 + $0x8] sm:$0xff]
      %v216 = vld [vmem:[#allocation2 + $0x10] sm:$0xff]
      %v217 = vld [vmem:[#allocation2 + $0x18] sm:$0xff]
      %v218 = vld [vmem:[#allocation2 + $0x20] sm:$0xff]
      %v219 = vld [vmem:[#allocation2 + $0x28] sm:$0xff]
      %v220 = vld [vmem:[#allocation2 + $0x30] sm:$0xff]
      %v221 = vld [vmem:[#allocation2 + $0x38] sm:$0xff]
      %v222 = vadd.f32 %v214, %v215
      %v223 = vadd.f32 %v222, %v216
      %v224 = vadd.f32 %v223, %v217
      %v225 = vadd.f32 %v224, %v218
      %v226 = vadd.f32 %v225, %v219
      %v227 = vadd.f32 %v226, %v220
      %v228 = vadd.f32 %v227, %v221
      %229 = vadd.xlane.f32.xlu0 %v228
      %v230 = vpop.xlane.xlu0 %229
      %v231 = vrot.slane %v230, 4
      %v232 = vadd.f32 %v230, %v231
      %v233 = vrot.slane %v232, 2
      %v234 = vadd.f32 %v232, %v233
      %v235 = vrot.slane %v234, 1
      %v236 = vadd.f32 %v234, %v235
      %s237 = vtos %v236
      %s238 = ssub.f32 0.0, %s237
      %v239 = vstv %s238
      %vm240 = vcmask 0
      %241 = vst.msk [vmem:[#allocation6] sm:$0x1] %vm240, %v239
    $region25: #{tpu_custom_call.1} parent=1 // pred_fallthru
      _
    // Predicated region
    $region26: #{tpu_custom_call.1} parent=1 // pred_check
      _
    $region27: #{tpu_custom_call.1} parent=1 // pred_check_branch
      %243 = sbr.rel (0) target = $region29
    $region28: #{tpu_custom_call.1} parent=1 // pred_region
      %245 = vsyncadd [#allocation5], 0
      %s247 = sshll.u32 [#allocation6], 4
      %s248 = int_to_ptr.vmem [resolvable:$true] %s247
      %s249 = sshll.u32 %s1, 4
      %s250 = int_to_ptr.hbm [resolvable:$true] %s249
      %252 = dma.vmem_to_hbm [thread:$0]  %s248, 16, %s250, [#allocation5]
    $region29: #{tpu_custom_call.1} parent=1 // pred_fallthru
      _
    // Predicated region
    $region30: #{tpu_custom_call.1} parent=1 // pred_check
      _
    $region31: #{tpu_custom_call.1} parent=1 // pred_check_branch
      %254 = sbr.rel (0) target = $region33
    $region32: #{tpu_custom_call.1} parent=1 // pred_region
      %256 = dma.done [#allocation5], 16
    $region33: #{tpu_custom_call.1} parent=1 // pred_fallthru
      _
    %257 = vsyncpa [#allocation4], 1
    %258 = vsyncpa [#allocation5], 1

</llo_original>
